<compile_context>
chip_gen: v6e
topology: v6e:2x2x1
jax: 0.10.0
libtpu: 0.0.40
codegen_flags: <defaults>
</compile_context>

<pallas_src>
import jax
import jax.numpy as jnp
from jax.experimental import pallas as pl
from jax.experimental.pallas import tpu as pltpu


def _upsample_kernel(x_ref, w_ref, b_ref, o_ref):
    # x_ref: (TH, W, C_in)        TH spatial rows (NHWC)
    # w_ref: (C_in, C_out)        1x1-conv weight with BN scale folded in
    # b_ref: (1, C_out)           folded BN shift (f32)
    # o_ref: (TH, 2, W, 2*C_out)  == NHWC rows {2h, 2h+1} of the 2x upsampled out
    th, w, c_in = x_ref.shape
    c_out = w_ref.shape[1]

    # Merge the two leading (sublane) dims -> one big-M matmul; lane dim unchanged.
    x = x_ref[...].reshape(th * w, c_in)
    y = jnp.dot(x, w_ref[...], preferred_element_type=jnp.float32)  # 1x1 conv
    y = y + b_ref[...]                                              # folded BN
    y = jnp.where(y > 0, y, 0.1 * y)                                # LeakyReLU(0.1)
    y3 = y.astype(o_ref.dtype).reshape(th, w, c_out)                # split leading dim

    # Nearest-neighbour 2x: the same tile lands at 4 positions of the
    # (TH, 2, W, 2*C_out) block. Four lane-aligned stores, 1x vreg pressure;
    # the store slot does the duplication instead of a broadcast in vregs.
    o_ref[:, 0, :, 0:c_out] = y3
    o_ref[:, 0, :, c_out:2 * c_out] = y3
    o_ref[:, 1, :, 0:c_out] = y3
    o_ref[:, 1, :, c_out:2 * c_out] = y3


def _fold_bn(conv_w, gamma, beta, run_mean, run_var, eps, act_dtype):
    """Fold eval-mode BatchNorm into the 1x1 conv (f32 fold, cast weight last)."""
    scale = gamma.astype(jnp.float32) / jnp.sqrt(run_var.astype(jnp.float32) + eps)
    w_eff = (conv_w[:, :, 0, 0].astype(jnp.float32) * scale[:, None]).T   # (C_in, C_out)
    b_eff = (beta.astype(jnp.float32) - run_mean.astype(jnp.float32) * scale)[None, :]
    return w_eff.astype(act_dtype), b_eff                                 # bias stays f32


def _pick_block_rows(n_rows, w, c_out, itemsize,
                     max_out_block_bytes=2 << 20, max_rows_per_block=1024):
    """Largest TH dividing n_rows such that the (double-buffered) blocks stay a
    few hundred KiB..2 MiB (safe vs. scoped VMEM on v5e/v6e/v7x) and the grid
    keeps >= 2 steps so both v7x TensorCores get work."""
    best = 1
    for th in range(1, n_rows + 1):
        if n_rows % th != 0:
            continue
        out_bytes = th * 2 * w * 2 * c_out * itemsize
        if out_bytes > max_out_block_bytes or th * w > max_rows_per_block:
            break
        if n_rows >= 2 and n_rows // th < 2:
            continue  # keep >= 2 parallel grid steps
        best = th
    return best


def upsample_forward_nhwc(x_nhwc, conv_w, gamma, beta, run_mean, run_var, eps=1e-5):
    """Transpose-free NHWC fast path: (N,H,W,C_in) -> (N,2H,2W,C_out)."""
    N, H, W, C_in = x_nhwc.shape
    C_out = conv_w.shape[0]
    w_eff, b_eff = _fold_bn(conv_w, gamma, beta, run_mean, run_var, eps, x_nhwc.dtype)

    R = N * H
    x_rows = x_nhwc.reshape(R, W, C_in)             # free reshape, no data movement
    isz = jnp.dtype(x_nhwc.dtype).itemsize
    TH = _pick_block_rows(R, W, C_out, isz)

    in_block = TH * W * C_in * isz
    out_block = TH * 2 * W * 2 * C_out * isz
    w_bytes = C_in * C_out * isz
    vmem_limit = int(min(48 << 20,
                         max(16 << 20, 2 * (in_block + out_block) + w_bytes + (2 << 20))))

    out4 = pl.pallas_call(
        _upsample_kernel,
        out_shape=jax.ShapeDtypeStruct((R, 2, W, 2 * C_out), x_nhwc.dtype),
        grid=(R // TH,),
        in_specs=[
            pl.BlockSpec((TH, W, C_in), lambda i: (i, 0, 0)),
            pl.BlockSpec((C_in, C_out), lambda i: (0, 0)),
            pl.BlockSpec((1, C_out), lambda i: (0, 0)),
        ],
        out_specs=pl.BlockSpec((TH, 2, W, 2 * C_out), lambda i: (i, 0, 0, 0)),
        compiler_params=pltpu.CompilerParams(
            dimension_semantics=("parallel",),
            vmem_limit_bytes=vmem_limit),
    )(x_rows, w_eff, b_eff)

    # (R, 2, W, 2*C_out) is already the contiguous layout of (N, 2H, 2W, C_out).
    return out4.reshape(N, 2 * H, 2 * W, C_out)


def upsample_forward(x_nchw, conv_w, gamma, beta, run_mean, run_var, eps=1e-5):
    """PyTorch-parity wrapper: NCHW in / NCHW out (inference-mode BN).

    If the surrounding network is NHWC, call `upsample_forward_nhwc` directly
    and skip both boundary transposes (the output transpose touches 4x data).
    """
    x_nhwc = jnp.transpose(x_nchw, (0, 2, 3, 1))
    out_nhwc = upsample_forward_nhwc(x_nhwc, conv_w, gamma, beta, run_mean, run_var, eps)
    return jnp.transpose(out_nhwc, (0, 3, 1, 2))


def _reference(x_nchw, conv_w, gamma, beta, run_mean, run_var, eps=1e-5):
    """Pure-JAX reference mirroring the PyTorch module (eval-mode BN)."""
    y = jnp.einsum("nchw,oc->nohw", x_nchw, conv_w[:, :, 0, 0])
    scale = (gamma / jnp.sqrt(run_var + eps))[None, :, None, None]
    shift = (beta - run_mean * gamma / jnp.sqrt(run_var + eps))[None, :, None, None]
    y = y * scale + shift
    y = jnp.where(y > 0, y, 0.1 * y)
    y = jnp.repeat(jnp.repeat(y, 2, axis=2), 2, axis=3)  # nearest x2
    return y


if __name__ == "__main__":
    # Upsample(in_channels=64, out_channels=128) on a (2, 64, 16, 16) NCHW input
    # (C_out=128 matches the real YOLOv4-tiny Upsample(256, 128) head width).
    N, C_in, H, W = 2, 64, 16, 16
    C_out = 128

    key = jax.random.PRNGKey(0)
    k_x, k_w, k_g, k_b, k_m, k_v = jax.random.split(key, 6)

    x = jax.random.normal(k_x, (N, C_in, H, W), dtype=jnp.float32)
    conv_w = jax.random.normal(k_w, (C_out, C_in, 1, 1), dtype=jnp.float32) * 0.05
    gamma = jax.random.normal(k_g, (C_out,), dtype=jnp.float32) * 0.1 + 1.0
    beta = jax.random.normal(k_b, (C_out,), dtype=jnp.float32) * 0.1
    run_mean = jax.random.normal(k_m, (C_out,), dtype=jnp.float32) * 0.1
    run_var = jax.random.uniform(k_v, (C_out,), dtype=jnp.float32, minval=0.5, maxval=1.5)

    out = upsample_forward(x, conv_w, gamma, beta, run_mean, run_var)
    out = jax.block_until_ready(out)

    ref = _reference(x, conv_w, gamma, beta, run_mean, run_var)
    assert out.shape == (N, C_out, 2 * H, 2 * W), out.shape
    assert jnp.allclose(out, ref, atol=1e-4, rtol=1e-4), \
        float(jnp.max(jnp.abs(out - ref)))

    # Also sanity-check the transpose-free NHWC fast path.
    out_nhwc = upsample_forward_nhwc(jnp.transpose(x, (0, 2, 3, 1)),
                                     conv_w, gamma, beta, run_mean, run_var)
    out_nhwc = jax.block_until_ready(out_nhwc)
    assert jnp.allclose(jnp.transpose(out_nhwc, (0, 3, 1, 2)), ref,
                        atol=1e-4, rtol=1e-4)

    print("KERNEL_OK")
</pallas_src>

<mosaic_0001>
module attributes {stable_mosaic.version = 11 : i64} {
  func.func @_upsample_kernel(%arg0: i32, %arg1: memref<16x16x64xf32, #tpu.memory_space<vmem>>, %arg2: memref<64x128xf32, #tpu.memory_space<vmem>>, %arg3: memref<1x128xf32, #tpu.memory_space<vmem>>, %arg4: memref<16x2x16x256xf32, #tpu.memory_space<vmem>>) attributes {dimension_semantics = [#tpu.dimension_semantics<parallel>], iteration_bounds = array<i64: 2>, scalar_prefetch = 0 : i64, scratch_operands = 0 : i64, tpu.core_type = #tpu.core_type<tc>, window_params = [{transform_indices = @transform_0, window_bounds = array<i64: 16, 16, 64>}, {pipeline_mode = #tpu.pipeline_mode<synchronous>, transform_indices = @transform_1, window_bounds = array<i64: 64, 128>}, {pipeline_mode = #tpu.pipeline_mode<synchronous>, transform_indices = @transform_2, window_bounds = array<i64: 1, 128>}, {transform_indices = @transform_3, window_bounds = array<i64: 16, 2, 16, 256>}]} {
    %c0 = arith.constant 0 : index
    %c0_0 = arith.constant 0 : index
    %c0_1 = arith.constant 0 : index
    %0 = vector.load %arg1[%c0, %c0_0, %c0_1] : memref<16x16x64xf32, #tpu.memory_space<vmem>>, vector<16x16x64xf32>
    %1 = vector.shape_cast %0 : vector<16x16x64xf32> to vector<256x64xf32>
    %c0_2 = arith.constant 0 : index
    %c0_3 = arith.constant 0 : index
    %2 = vector.load %arg2[%c0_2, %c0_3] : memref<64x128xf32, #tpu.memory_space<vmem>>, vector<64x128xf32>
    %cst = arith.constant dense<0.000000e+00> : vector<256x128xf32>
    %3 = tpu.matmul %1, %2, %cst {dimension_numbers = #tpu.dot_dimension_numbers<[1], [0], [0], [1], [0, 0, 1, 1], [], []>} : vector<256x64xf32>, vector<64x128xf32>, vector<256x128xf32> -> vector<256x128xf32>
    %c0_4 = arith.constant 0 : index
    %c0_5 = arith.constant 0 : index
    %4 = vector.load %arg3[%c0_4, %c0_5] : memref<1x128xf32, #tpu.memory_space<vmem>>, vector<1x128xf32>
    %5 = vector.broadcast %4 : vector<1x128xf32> to vector<256x128xf32>
    %6 = arith.addf %3, %5 : vector<256x128xf32>
    %cst_6 = arith.constant 0.000000e+00 : f32
    %7 = vector.broadcast %cst_6 : f32 to vector<256x128xf32>
    %8 = arith.cmpf ogt, %6, %7 : vector<256x128xf32>
    %cst_7 = arith.constant 1.000000e-01 : f32
    %9 = vector.broadcast %cst_7 : f32 to vector<256x128xf32>
    %10 = arith.mulf %9, %6 : vector<256x128xf32>
    %11 = arith.select %8, %6, %10 : vector<256x128xi1>, vector<256x128xf32>
    %12 = vector.shape_cast %11 : vector<256x128xf32> to vector<16x16x128xf32>
    %c0_8 = arith.constant 0 : index
    %c0_9 = arith.constant 0 : index
    %c0_10 = arith.constant 0 : index
    %c0_11 = arith.constant 0 : index
    %13 = vector.load %arg4[%c0_8, %c0_9, %c0_10, %c0_11] : memref<16x2x16x256xf32, #tpu.memory_space<vmem>>, vector<16x1x16x128xf32>
    %14 = vector.shape_cast %13 : vector<16x1x16x128xf32> to vector<16x16x128xf32>
    %15 = vector.shape_cast %12 : vector<16x16x128xf32> to vector<16x1x16x128xf32>
    tpu.vector_store %arg4[%c0_8, %c0_9, %c0_10, %c0_11], %15 {strides = array<i32>} : memref<16x2x16x256xf32, #tpu.memory_space<vmem>>, vector<16x1x16x128xf32>,
    %c0_12 = arith.constant 0 : index
    %c0_13 = arith.constant 0 : index
    %c0_14 = arith.constant 0 : index
    %c128 = arith.constant 128 : index
    %16 = vector.load %arg4[%c0_12, %c0_13, %c0_14, %c128] : memref<16x2x16x256xf32, #tpu.memory_space<vmem>>, vector<16x1x16x128xf32>
    %17 = vector.shape_cast %16 : vector<16x1x16x128xf32> to vector<16x16x128xf32>
    %18 = vector.shape_cast %12 : vector<16x16x128xf32> to vector<16x1x16x128xf32>
    tpu.vector_store %arg4[%c0_12, %c0_13, %c0_14, %c128], %18 {strides = array<i32>} : memref<16x2x16x256xf32, #tpu.memory_space<vmem>>, vector<16x1x16x128xf32>,
    %c0_15 = arith.constant 0 : index
    %c1 = arith.constant 1 : index
    %c0_16 = arith.constant 0 : index
    %c0_17 = arith.constant 0 : index
    %19 = vector.load %arg4[%c0_15, %c1, %c0_16, %c0_17] : memref<16x2x16x256xf32, #tpu.memory_space<vmem>>, vector<16x1x16x128xf32>
    %20 = vector.shape_cast %19 : vector<16x1x16x128xf32> to vector<16x16x128xf32>
    %21 = vector.shape_cast %12 : vector<16x16x128xf32> to vector<16x1x16x128xf32>
    tpu.vector_store %arg4[%c0_15, %c1, %c0_16, %c0_17], %21 {strides = array<i32>} : memref<16x2x16x256xf32, #tpu.memory_space<vmem>>, vector<16x1x16x128xf32>,
    %c0_18 = arith.constant 0 : index
    %c1_19 = arith.constant 1 : index
    %c0_20 = arith.constant 0 : index
    %c128_21 = arith.constant 128 : index
    %22 = vector.load %arg4[%c0_18, %c1_19, %c0_20, %c128_21] : memref<16x2x16x256xf32, #tpu.memory_space<vmem>>, vector<16x1x16x128xf32>
    %23 = vector.shape_cast %22 : vector<16x1x16x128xf32> to vector<16x16x128xf32>
    %24 = vector.shape_cast %12 : vector<16x16x128xf32> to vector<16x1x16x128xf32>
    tpu.vector_store %arg4[%c0_18, %c1_19, %c0_20, %c128_21], %24 {strides = array<i32>} : memref<16x2x16x256xf32, #tpu.memory_space<vmem>>, vector<16x1x16x128xf32>,
    return
  }
  func.func @transform_0(%arg0: i32) -> (i32, i32, i32) {
    %c0_i32 = arith.constant 0 : i32
    %c0_i32_0 = arith.constant 0 : i32
    %c0_i32_1 = arith.constant 0 : i32
    return %arg0, %c0_i32, %c0_i32_0 : i32, i32, i32
  }
  func.func @transform_1(%arg0: i32) -> (i32, i32) {
    %c0_i32 = arith.constant 0 : i32
    %c0_i32_0 = arith.constant 0 : i32
    %c0_i32_1 = arith.constant 0 : i32
    return %c0_i32, %c0_i32_0 : i32, i32
  }
  func.func @transform_2(%arg0: i32) -> (i32, i32) {
    %c0_i32 = arith.constant 0 : i32
    %c0_i32_0 = arith.constant 0 : i32
    %c0_i32_1 = arith.constant 0 : i32
    return %c0_i32, %c0_i32_0 : i32, i32
  }
  func.func @transform_3(%arg0: i32) -> (i32, i32, i32, i32) {
    %c0_i32 = arith.constant 0 : i32
    %c0_i32_0 = arith.constant 0 : i32
    %c0_i32_1 = arith.constant 0 : i32
    %c0_i32_2 = arith.constant 0 : i32
    return %arg0, %c0_i32, %c0_i32_0, %c0_i32_1 : i32, i32, i32, i32
  }
}

</mosaic_0001>

<llo_original>
// kernel: tpu_custom_call.1
$region0: #{tpu_custom_call.1}
  #allocation0 [shape = 'u32[]', space=smem, size = 0x4, offset = 0x4, fixed_abs, tag = 'smem constant byte address 0x4 - core index']
  #allocation1 [shape = 'u32[144,128]{1,0:T(1,128)}', space=vmem, size = 0x12000, scoped, tag = 'internal scratch']
  %s0 = inlined_call_operand.hbm [shape: f32[32,16,64], index: 0, kind: input, shape index: {}]
  %s1 = inlined_call_operand.hbm [shape: f32[64,128], index: 1, kind: input, shape index: {}]
  %s2 = inlined_call_operand.vmem [shape: f32[1,128], index: 2, kind: input, shape index: {}]
  %s3 = inlined_call_operand.hbm [shape: f32[32,2,16,256], index: 3, kind: output, shape index: {}]
  %s4 = sld [smem:[#allocation0]]
  $region53: #{tpu_custom_call.1} parent=0
    _
  %s6 = ssub.s32 1, %s4
  %s7 = scalar_select 0, %s6, %s4
  $region1: #{tpu_custom_call.1} parent=0
    #allocation2 [shape = 'u8[262144]{0}', space=vmem, size = 0x40000, scoped, tag = 'input window, operand 0']
    #allocation3 [shape = 's32[2]{0}', space=sflag, size = 0x8, scoped, tag = 'scoped memory for tpu_custom_call.1']
    #allocation4 [shape = 's32[2]{0}', space=sflag, size = 0x8, scoped, tag = 'scoped memory for tpu_custom_call.1']
    #allocation5 [shape = 'u8[32768]{0}', space=vmem, size = 0x8000, scoped, tag = 'input window, operand 1, single buffered']
    #allocation6 [shape = 's32[1]{0}', space=sflag, size = 0x4, scoped, tag = 'scoped memory for tpu_custom_call.1']
    #allocation7 [shape = 'u8[1048576]{0}', space=vmem, size = 0x100000, scoped, tag = 'output window, operand 0']
    %8 = vsyncpa [#allocation3], 0
    %s9 = scalar_lea.sflag [#allocation3], 1
    %10 = vsyncpa %s9, 0
    %11 = vsyncpa [#allocation6], 0
    %12 = vsyncpa [#allocation4], 0
    %s13 = scalar_lea.sflag [#allocation4], 1
    %14 = vsyncpa %s13, 0
    loop: start=0, step=1, limit=4
    $region2: #{tpu_custom_call.1} parent=1 // loop_pre_header
      _
    $region3: #{tpu_custom_call.1} parent=1 // loop_header
      %s16 = sphi 0, %s20
      %p17 = scmp.ge.s32.totalorder %s16, 4
      %s26 = sphi 0, %s28
      %s29 = sphi 0, %s26
      %s30 = sphi 0, %s29
      %s46 = sphi 0, %s30
      %s50 = sphi 0, %s50
      %s52 = sphi 0, %s50
      %s53 = sphi 0, %s52
      %s67 = sphi 0, %s53
      %s71 = sphi 0, %s71
      %s73 = sphi 0, %s71
      %s74 = sphi 0, %s73
      %s88 = sphi 0, %s74
      %s94 = sphi 0, %s96
      %s97 = sphi 0, %s94
      %s98 = sphi 0, %s97
      %s114 = sphi 0, %s98
    $region4: #{tpu_custom_call.1} parent=1 // loop_header_branch
      %19 = sbr.rel (%p17) target = $region8
    $region5: #{tpu_custom_call.1} parent=1 // loop_body
      %s21 = ssub.s32 %s16, 1
      %s22 = ssub.s32 %s16, 2
      %s23 = sadd.s32 %s16, 1
      %s24 = ssub.s32 %s16, %s23
      %p25 = scmp.eq.s32.totalorder %s24, 0
      %s27 = sadd.s32 %s26, 1
      %s28 = scalar_select %p25, %s26, %s27
      %p31 = pneg %p25
      %p32 = scmp.eq.s32.totalorder %s16, 1
      %p33 = por %p31, %p32
      %p34 = scmp.ne.s32.totalorder %s26, %s29
      %p35 = scmp.eq.s32.totalorder %s16, 0
      %p36 = por %p34, %p35
      %p37 = scmp.ne.s32.totalorder %s26, %s29
      %p38 = scmp.eq.s32.totalorder %s21, 1
      %p39 = por %p37, %p38
      %p40 = scmp.ne.s32.totalorder %s29, %s30
      %p41 = scmp.eq.s32.totalorder %s21, 0
      %p42 = por %p40, %p41
      %p43 = scmp.ne.s32.totalorder %s29, %s30
      %p44 = scmp.eq.s32.totalorder %s22, 1
      %p45 = por %p43, %p44
      %p47 = scmp.ne.s32.totalorder %s30, %s46
      %p48 = scmp.eq.s32.totalorder %s22, 0
      %p49 = por %p47, %p48
      %s51 = sadd.s32 %s50, 1
      %p54 = scmp.eq.s32.totalorder %s16, 1
      %p55 = scmp.ne.s32.totalorder %s50, %s52
      %p56 = scmp.eq.s32.totalorder %s16, 0
      %p57 = por %p55, %p56
      %p58 = scmp.ne.s32.totalorder %s50, %s52
      %p59 = scmp.eq.s32.totalorder %s21, 1
      %p60 = por %p58, %p59
      %p61 = scmp.ne.s32.totalorder %s52, %s53
      %p62 = scmp.eq.s32.totalorder %s21, 0
      %p63 = por %p61, %p62
      %p64 = scmp.ne.s32.totalorder %s52, %s53
      %p65 = scmp.eq.s32.totalorder %s22, 1
      %p66 = por %p64, %p65
      %p68 = scmp.ne.s32.totalorder %s53, %s67
      %p69 = scmp.eq.s32.totalorder %s22, 0
      %p70 = por %p68, %p69
      %s72 = sadd.s32 %s71, 1
      %p75 = scmp.eq.s32.totalorder %s16, 1
      %p76 = scmp.ne.s32.totalorder %s71, %s73
      %p77 = scmp.eq.s32.totalorder %s16, 0
      %p78 = por %p76, %p77
      %p79 = scmp.ne.s32.totalorder %s71, %s73
      %p80 = scmp.eq.s32.totalorder %s21, 1
      %p81 = por %p79, %p80
      %p82 = scmp.ne.s32.totalorder %s73, %s74
      %p83 = scmp.eq.s32.totalorder %s21, 0
      %p84 = por %p82, %p83
      %p85 = scmp.ne.s32.totalorder %s73, %s74
      %p86 = scmp.eq.s32.totalorder %s22, 1
      %p87 = por %p85, %p86
      %p89 = scmp.ne.s32.totalorder %s74, %s88
      %p90 = scmp.eq.s32.totalorder %s22, 0
      %p91 = por %p89, %p90
      %s92 = ssub.s32 %s16, %s23
      %p93 = scmp.eq.s32.totalorder %s92, 0
      %s95 = sadd.s32 %s94, 1
      %s96 = scalar_select %p93, %s94, %s95
      %p99 = pneg %p93
      %p100 = scmp.eq.s32.totalorder %s16, 1
      %p101 = por %p99, %p100
      %p102 = scmp.ne.s32.totalorder %s94, %s97
      %p103 = scmp.eq.s32.totalorder %s16, 0
      %p104 = por %p102, %p103
      %p105 = scmp.ne.s32.totalorder %s94, %s97
      %p106 = scmp.eq.s32.totalorder %s21, 1
      %p107 = por %p105, %p106
      %p108 = scmp.ne.s32.totalorder %s97, %s98
      %p109 = scmp.eq.s32.totalorder %s21, 0
      %p110 = por %p108, %p109
      %p111 = scmp.ne.s32.totalorder %s97, %s98
      %p112 = scmp.eq.s32.totalorder %s22, 1
      %p113 = por %p111, %p112
      %p115 = scmp.ne.s32.totalorder %s98, %s114
      %p116 = scmp.eq.s32.totalorder %s22, 0
      %p117 = por %p115, %p116
      %p118 = scmp.le.s32.totalorder 1, %s16
      %p119 = scmp.lt.s32.totalorder %s16, 3
      %p120 = pnand %p118, %p119
      %p121 = pneg %p120
      // Predicated region
      $region9: #{tpu_custom_call.1} parent=5 // pred_check
        _
      $region10: #{tpu_custom_call.1} parent=5 // pred_check_branch
        %123 = sbr.rel (%p120) target = $region12
      $region11: #{tpu_custom_call.1} parent=5 // pred_region
        %s124 = ssub.s32 %s16, 1
        // Predicated region
        $region13: #{tpu_custom_call.1} parent=11 // pred_check
          %p125 = pneg %p63
        $region14: #{tpu_custom_call.1} parent=11 // pred_check_branch
          %127 = sbr.rel (%p125) target = $region16
        $region15: #{tpu_custom_call.1} parent=11 // pred_region
          %s129 = ssub.s32 1024, 1024
          %130 = vsyncadd [#allocation6], %s129
          %s131 = sshll.u32 [#allocation5], 4
          %s132 = int_to_ptr.vmem [resolvable:$true] %s131
          %137 = dma.hbm_to_vmem [thread:$0]  %s1, 1024, %s132, [#allocation6], 128, 128, 8
        $region16: #{tpu_custom_call.1} parent=11 // pred_fallthru
          _
        // Predicated region
        $region17: #{tpu_custom_call.1} parent=11 // pred_check
          %p138 = pneg %p84
        $region18: #{tpu_custom_call.1} parent=11 // pred_check_branch
          %140 = sbr.rel (%p138) target = $region20
        $region19: #{tpu_custom_call.1} parent=11 // pred_region
          _
        $region20: #{tpu_custom_call.1} parent=11 // pred_fallthru
          _
      $region12: #{tpu_custom_call.1} parent=5 // pred_fallthru
        _
      %p141 = scmp.lt.s32.totalorder %s16, 2
      // Predicated region
      $region21: #{tpu_custom_call.1} parent=5 // pred_check
        %p142 = pneg %p141
      $region22: #{tpu_custom_call.1} parent=5 // pred_check_branch
        %144 = sbr.rel (%p142) target = $region24
      $region23: #{tpu_custom_call.1} parent=5 // pred_region
        // Predicated region
        $region25: #{tpu_custom_call.1} parent=23 // pred_check
          %p145 = pneg %p36
        $region26: #{tpu_custom_call.1} parent=23 // pred_check_branch
          %147 = sbr.rel (%p145) target = $region28
        $region27: #{tpu_custom_call.1} parent=23 // pred_region
          %s148 = sand.u32 %s26, 1
          %s149 = scalar_lea.sflag [#allocation3], %s148
          %s150 = sand.u32 %s26, 1
          %s151 = smul.addr %s150, 256
          %s152 = scalar_lea.vmem [#allocation2], %s151
          %s153 = smul.u32 16, %s16
          %s155 = ssub.s32 4096, 4096
          %156 = vsyncadd %s149, %s155
          %s157 = smul.addr %s153, 2
          %s158 = smul.addr %s157, 128
          %s159 = scalar_lea.hbm %s0, %s158
          %s160 = sshll.u32 %s152, 4
          %s161 = int_to_ptr.vmem [resolvable:$true] %s160
          %166 = dma.hbm_to_vmem [thread:$0]  %s159, 4096, %s161, %s149, 128, 128, 8
        $region28: #{tpu_custom_call.1} parent=23 // pred_fallthru
          _
      $region24: #{tpu_custom_call.1} parent=5 // pred_fallthru
        _
      %p167 = scmp.le.s32.totalorder 1, %s16
      %p168 = scmp.lt.s32.totalorder %s16, 3
      %p169 = pnand %p167, %p168
      %p170 = pneg %p169
      // Predicated region
      $region29: #{tpu_custom_call.1} parent=5 // pred_check
        _
      $region30: #{tpu_custom_call.1} parent=5 // pred_check_branch
        %172 = sbr.rel (%p169) target = $region32
      $region31: #{tpu_custom_call.1} parent=5 // pred_region
        %s173 = ssub.s32 %s16, 1
        %s174 = sand.u32 %s29, 1
        %s175 = scalar_lea.sflag [#allocation3], %s174
        %s176 = sand.u32 %s29, 1
        %s177 = smul.addr %s176, 256
        %s178 = scalar_lea.vmem [#allocation2], %s177
        // Predicated region
        $region33: #{tpu_custom_call.1} parent=31 // pred_check
          %p179 = pneg %p42
        $region34: #{tpu_custom_call.1} parent=31 // pred_check_branch
          %181 = sbr.rel (%p179) target = $region36
        $region35: #{tpu_custom_call.1} parent=31 // pred_region
          %182 = dma.done %s175, 4096
        $region36: #{tpu_custom_call.1} parent=31 // pred_fallthru
          _
        // Predicated region
        $region37: #{tpu_custom_call.1} parent=31 // pred_check
          %p183 = pneg %p63
        $region38: #{tpu_custom_call.1} parent=31 // pred_check_branch
          %185 = sbr.rel (%p183) target = $region40
        $region39: #{tpu_custom_call.1} parent=31 // pred_region
          %186 = dma.done [#allocation6], 1024
        $region40: #{tpu_custom_call.1} parent=31 // pred_fallthru
          _
        %s187 = sand.u32 %s29, 1
        %s188 = scalar_lea.sflag [#allocation3], %s187
        %s189 = sand.u32 %s29, 1
        %s190 = smul.addr %s189, 256
        %s191 = scalar_lea.vmem [#allocation2], %s190
        %p192 = pneg %p42
        %p193 = pneg %p39
        %p194 = pneg %p63
        %p195 = pneg %p60
        %p196 = pneg %p84
        %p197 = pneg %p81
        %p198 = pneg %p110
        %p199 = pneg %p107
        %s200 = sand.u32 %s97, 1
        %s201 = scalar_lea.sflag [#allocation4], %s200
        %s202 = sand.u32 %s97, 1
        %s203 = smul.addr %s202, 1024
        %s204 = scalar_lea.vmem [#allocation7], %s203
        %s205 = smul.u32 16, %s21
        %s206 = smul.u32 16, %s21
        %v207 = vld [vmem:[%s178] sm:$0xff]
        %v208 = vld [vmem:[%s178 + $0x8] sm:$0xff]
        %v209 = vld [vmem:[%s178 + $0x10] sm:$0xff]
        %v210 = vld [vmem:[%s178 + $0x18] sm:$0xff]
        %v211 = vld [vmem:[%s178 + $0x20] sm:$0xff]
        %v212 = vld [vmem:[%s178 + $0x28] sm:$0xff]
        %v213 = vld [vmem:[%s178 + $0x30] sm:$0xff]
        %v214 = vld [vmem:[%s178 + $0x38] sm:$0xff]
        %v215 = vld [vmem:[%s178 + $0x40] sm:$0xff]
        %v216 = vld [vmem:[%s178 + $0x48] sm:$0xff]
        %v217 = vld [vmem:[%s178 + $0x50] sm:$0xff]
        %v218 = vld [vmem:[%s178 + $0x58] sm:$0xff]
        %v219 = vld [vmem:[%s178 + $0x60] sm:$0xff]
        %v220 = vld [vmem:[%s178 + $0x68] sm:$0xff]
        %v221 = vld [vmem:[%s178 + $0x70] sm:$0xff]
        %v222 = vld [vmem:[%s178 + $0x78] sm:$0xff]
        %v223 = vld [vmem:[%s178 + $0x80] sm:$0xff]
        %v224 = vld [vmem:[%s178 + $0x88] sm:$0xff]
        %v225 = vld [vmem:[%s178 + $0x90] sm:$0xff]
        %v226 = vld [vmem:[%s178 + $0x98] sm:$0xff]
        %v227 = vld [vmem:[%s178 + $0xa0] sm:$0xff]
        %v228 = vld [vmem:[%s178 + $0xa8] sm:$0xff]
        %v229 = vld [vmem:[%s178 + $0xb0] sm:$0xff]
        %v230 = vld [vmem:[%s178 + $0xb8] sm:$0xff]
        %v231 = vld [vmem:[%s178 + $0xc0] sm:$0xff]
        %v232 = vld [vmem:[%s178 + $0xc8] sm:$0xff]
        %v233 = vld [vmem:[%s178 + $0xd0] sm:$0xff]
        %v234 = vld [vmem:[%s178 + $0xd8] sm:$0xff]
        %v235 = vld [vmem:[%s178 + $0xe0] sm:$0xff]
        %v236 = vld [vmem:[%s178 + $0xe8] sm:$0xff]
        %v237 = vld [vmem:[%s178 + $0xf0] sm:$0xff]
        %v238 = vld [vmem:[%s178 + $0xf8] sm:$0xff]
        %v239 = vld [vmem:[#allocation5] sm:$0xff]
        %v240 = vld [vmem:[#allocation5 + $0x8] sm:$0xff]
        %v241 = vld [vmem:[#allocation5 + $0x10] sm:$0xff]
        %v242 = vld [vmem:[#allocation5 + $0x18] sm:$0xff]
        %v243 = vld [vmem:[#allocation5 + $0x20] sm:$0xff]
        %v244 = vld [vmem:[#allocation5 + $0x28] sm:$0xff]
        %v245 = vld [vmem:[#allocation5 + $0x30] sm:$0xff]
        %v246 = vld [vmem:[#allocation5 + $0x38] sm:$0xff]
        %v247 = vld [vmem:[%s2] sm:$0x1]
        %v249 = vlaneseq
        %v250 = vshrl.u32 %v249, 7
        %v251 = vsub.s32 0, %v250
        %v252 = vrot.slane %v247, %v251
        %vm254 = vcmask 523264
        %v256 = vsel %vm254, %v207, 0
        %v259 = vsel %vm254, %v208, 0
        %v262 = vsel %vm254, %v209, 0
        %v265 = vsel %vm254, %v210, 0
        %v268 = vsel %vm254, %v211, 0
        %v271 = vsel %vm254, %v212, 0
        %v274 = vsel %vm254, %v213, 0
        %v277 = vsel %vm254, %v214, 0
        %v280 = vsel %vm254, %v215, 0
        %v283 = vsel %vm254, %v216, 0
        %v286 = vsel %vm254, %v217, 0
        %v289 = vsel %vm254, %v218, 0
        %v292 = vsel %vm254, %v219, 0
        %v295 = vsel %vm254, %v220, 0
        %v298 = vsel %vm254, %v221, 0
        %v301 = vsel %vm254, %v222, 0
        %v304 = vsel %vm254, %v223, 0
        %v307 = vsel %vm254, %v224, 0
        %v310 = vsel %vm254, %v225, 0
        %v313 = vsel %vm254, %v226, 0
        %v316 = vsel %vm254, %v227, 0
        %v319 = vsel %vm254, %v228, 0
        %v322 = vsel %vm254, %v229, 0
        %v325 = vsel %vm254, %v230, 0
        %v328 = vsel %vm254, %v231, 0
        %v331 = vsel %vm254, %v232, 0
        %v334 = vsel %vm254, %v233, 0
        %v337 = vsel %vm254, %v234, 0
        %v340 = vsel %vm254, %v235, 0
        %v343 = vsel %vm254, %v236, 0
        %v346 = vsel %vm254, %v237, 0
        %v349 = vsel %vm254, %v238, 0
        %351 = vmatprep.subr.mxu0 0.0
        %352 = vmatpush1.msra.mxu0 0.0
        %353 = vmatprep.subr.mxu0 0.0
        %354 = vmatpush1.msra.mxu0 0.0
        %355 = vmatprep.subr.mxu0 0.0
        %356 = vmatpush1.msra.mxu0 0.0
        %357 = vmatprep.subr.mxu0 0.0
        %358 = vmatpush1.msra.mxu0 0.0
        %359 = vmatprep.subr.mxu0 0.0
        %360 = vmatpush1.msra.mxu0 0.0
        %361 = vmatprep.subr.mxu0 0.0
        %362 = vmatpush1.msra.mxu0 0.0
        %363 = vmatprep.subr.mxu0 0.0
        %364 = vmatpush1.msra.mxu0 0.0
        %365 = vmatprep.subr.mxu0 0.0
        %366 = vmatpush1.msra.mxu0 0.0
        %367 = vmatprep.subr.mxu0 0.0
        %368 = vmatpush1.msra.mxu0 %v246
        %369 = vmatprep.subr.mxu0 0.0
        %370 = vmatpush1.msra.mxu0 %v245
        %371 = vmatprep.subr.mxu0 0.0
        %372 = vmatpush1.msra.mxu0 %v244
        %373 = vmatprep.subr.mxu0 0.0
        %374 = vmatpush1.msra.mxu0 %v243
        %375 = vmatprep.subr.mxu0 0.0
        %376 = vmatpush1.msra.mxu0 %v242
        %377 = vmatprep.subr.mxu0 0.0
        %378 = vmatpush1.msra.mxu0 %v241
        %379 = vmatprep.subr.mxu0 0.0
        %380 = vmatpush1.msra.mxu0 %v240
        %381 = vmatprep.subr.mxu0 0.0
        %382 = vmatpush1.msra.mxu0 %v239
        %383 = vmatprep.subr.mxu0 0.0
        %384 = vmatpush2.msra.mxu0 0.0
        %385 = vmatprep.subr.mxu0 0.0
        %386 = vmatpush2.msra.mxu0 0.0
        %387 = vmatprep.subr.mxu0 0.0
        %388 = vmatpush2.msra.mxu0 0.0
        %389 = vmatprep.subr.mxu0 0.0
        %390 = vmatpush2.msra.mxu0 0.0
        %391 = vmatprep.subr.mxu0 0.0
        %392 = vmatpush2.msra.mxu0 0.0
        %393 = vmatprep.subr.mxu0 0.0
        %394 = vmatpush2.msra.mxu0 0.0
        %395 = vmatprep.subr.mxu0 0.0
        %396 = vmatpush2.msra.mxu0 0.0
        %397 = vmatprep.subr.mxu0 0.0
        %398 = vmatpush2.msra.mxu0 0.0
        %399 = vmatprep.subr.mxu0 0.0
        %400 = vmatpush2.msra.mxu0 0.0
        %401 = vmatprep.subr.mxu0 0.0
        %402 = vmatpush2.msra.mxu0 0.0
        %403 = vmatprep.subr.mxu0 0.0
        %404 = vmatpush2.msra.mxu0 0.0
        %405 = vmatprep.subr.mxu0 0.0
        %406 = vmatpush2.msra.mxu0 0.0
        %407 = vmatprep.subr.mxu0 0.0
        %408 = vmatpush2.msra.mxu0 0.0
        %409 = vmatprep.subr.mxu0 0.0
        %410 = vmatpush2.msra.mxu0 0.0
        %411 = vmatprep.subr.mxu0 0.0
        %412 = vmatpush2.msra.mxu0 0.0
        %413 = vmatprep.subr.mxu0 0.0
        %414 = vmatpush2.msra.mxu0 0.0
        %415 = vmatprep.mubr.f32.mxu0 0.0
        %416 = vmatmul.mubr.f32.gmra.mxu0 %v256
        %v417 = vpop.f32.mrf.mxu0
        %v418 = vadd.f32 %v252, %v417
        %v419 = vpop.f32.mrf.mxu0
        %420 = vmatprep.mubr.f32.mxu0 0.0
        %421 = vmatmul.mubr.f32.gmra.mxu0 %v259
        %v422 = vpop.f32.mrf.mxu0
        %v423 = vadd.f32 %v252, %v422
        %v424 = vpop.f32.mrf.mxu0
        %425 = vmatprep.mubr.f32.mxu0 0.0
        %426 = vmatmul.mubr.f32.gmra.mxu0 %v262
        %v427 = vpop.f32.mrf.mxu0
        %v428 = vadd.f32 %v252, %v427
        %v429 = vpop.f32.mrf.mxu0
        %430 = vmatprep.mubr.f32.mxu0 0.0
        %431 = vmatmul.mubr.f32.gmra.mxu0 %v265
        %v432 = vpop.f32.mrf.mxu0
        %v433 = vadd.f32 %v252, %v432
        %v434 = vpop.f32.mrf.mxu0
        %435 = vmatprep.mubr.f32.mxu0 0.0
        %436 = vmatmul.mubr.f32.gmra.mxu0 %v268
        %v437 = vpop.f32.mrf.mxu0
        %v438 = vadd.f32 %v252, %v437
        %v439 = vpop.f32.mrf.mxu0
        %440 = vmatprep.mubr.f32.mxu0 0.0
        %441 = vmatmul.mubr.f32.gmra.mxu0 %v271
        %v442 = vpop.f32.mrf.mxu0
        %v443 = vadd.f32 %v252, %v442
        %v444 = vpop.f32.mrf.mxu0
        %445 = vmatprep.mubr.f32.mxu0 0.0
        %446 = vmatmul.mubr.f32.gmra.mxu0 %v274
        %v447 = vpop.f32.mrf.mxu0
        %v448 = vadd.f32 %v252, %v447
        %v449 = vpop.f32.mrf.mxu0
        %450 = vmatprep.mubr.f32.mxu0 0.0
        %451 = vmatmul.mubr.f32.gmra.mxu0 %v277
        %v452 = vpop.f32.mrf.mxu0
        %v453 = vadd.f32 %v252, %v452
        %v454 = vpop.f32.mrf.mxu0
        %455 = vmatprep.mubr.f32.mxu0 0.0
        %456 = vmatmul.mubr.f32.gmra.mxu0 %v280
        %v457 = vpop.f32.mrf.mxu0
        %v458 = vadd.f32 %v252, %v457
        %v459 = vpop.f32.mrf.mxu0
        %460 = vmatprep.mubr.f32.mxu0 0.0
        %461 = vmatmul.mubr.f32.gmra.mxu0 %v283
        %v462 = vpop.f32.mrf.mxu0
        %v463 = vadd.f32 %v252, %v462
        %v464 = vpop.f32.mrf.mxu0
        %465 = vmatprep.mubr.f32.mxu0 0.0
        %466 = vmatmul.mubr.f32.gmra.mxu0 %v286
        %v467 = vpop.f32.mrf.mxu0
        %v468 = vadd.f32 %v252, %v467
        %v469 = vpop.f32.mrf.mxu0
        %470 = vmatprep.mubr.f32.mxu0 0.0
        %471 = vmatmul.mubr.f32.gmra.mxu0 %v289
        %v472 = vpop.f32.mrf.mxu0
        %v473 = vadd.f32 %v252, %v472
        %v474 = vpop.f32.mrf.mxu0
        %475 = vmatprep.mubr.f32.mxu0 0.0
        %476 = vmatmul.mubr.f32.gmra.mxu0 %v292
        %v477 = vpop.f32.mrf.mxu0
        %v478 = vadd.f32 %v252, %v477
        %v479 = vpop.f32.mrf.mxu0
        %480 = vmatprep.mubr.f32.mxu0 0.0
        %481 = vmatmul.mubr.f32.gmra.mxu0 %v295
        %v482 = vpop.f32.mrf.mxu0
        %v483 = vadd.f32 %v252, %v482
        %v484 = vpop.f32.mrf.mxu0
        %485 = vmatprep.mubr.f32.mxu0 0.0
        %486 = vmatmul.mubr.f32.gmra.mxu0 %v298
        %v487 = vpop.f32.mrf.mxu0
        %v488 = vadd.f32 %v252, %v487
        %v489 = vpop.f32.mrf.mxu0
        %490 = vmatprep.mubr.f32.mxu0 0.0
        %491 = vmatmul.mubr.f32.gmra.mxu0 %v301
        %v492 = vpop.f32.mrf.mxu0
        %v493 = vadd.f32 %v252, %v492
        %v494 = vpop.f32.mrf.mxu0
        %495 = vmatprep.mubr.f32.mxu0 0.0
        %496 = vmatmul.mubr.f32.gmra.mxu0 %v304
        %v497 = vpop.f32.mrf.mxu0
        %v498 = vadd.f32 %v252, %v497
        %v499 = vpop.f32.mrf.mxu0
        %500 = vmatprep.mubr.f32.mxu0 0.0
        %501 = vmatmul.mubr.f32.gmra.mxu0 %v307
        %v502 = vpop.f32.mrf.mxu0
        %v503 = vadd.f32 %v252, %v502
        %v504 = vpop.f32.mrf.mxu0
        %505 = vmatprep.mubr.f32.mxu0 0.0
        %506 = vmatmul.mubr.f32.gmra.mxu0 %v310
        %v507 = vpop.f32.mrf.mxu0
        %v508 = vadd.f32 %v252, %v507
        %v509 = vpop.f32.mrf.mxu0
        %510 = vmatprep.mubr.f32.mxu0 0.0
        %511 = vmatmul.mubr.f32.gmra.mxu0 %v313
        %v512 = vpop.f32.mrf.mxu0
        %v513 = vadd.f32 %v252, %v512
        %v514 = vpop.f32.mrf.mxu0
        %515 = vmatprep.mubr.f32.mxu0 0.0
        %516 = vmatmul.mubr.f32.gmra.mxu0 %v316
        %v517 = vpop.f32.mrf.mxu0
        %v518 = vadd.f32 %v252, %v517
        %v519 = vpop.f32.mrf.mxu0
        %520 = vmatprep.mubr.f32.mxu0 0.0
        %521 = vmatmul.mubr.f32.gmra.mxu0 %v319
        %v522 = vpop.f32.mrf.mxu0
        %v523 = vadd.f32 %v252, %v522
        %v524 = vpop.f32.mrf.mxu0
        %525 = vmatprep.mubr.f32.mxu0 0.0
        %526 = vmatmul.mubr.f32.gmra.mxu0 %v322
        %v527 = vpop.f32.mrf.mxu0
        %v528 = vadd.f32 %v252, %v527
        %v529 = vpop.f32.mrf.mxu0
        %530 = vmatprep.mubr.f32.mxu0 0.0
        %531 = vmatmul.mubr.f32.gmra.mxu0 %v325
        %v532 = vpop.f32.mrf.mxu0
        %v533 = vadd.f32 %v252, %v532
        %v534 = vpop.f32.mrf.mxu0
        %535 = vmatprep.mubr.f32.mxu0 0.0
        %536 = vmatmul.mubr.f32.gmra.mxu0 %v328
        %v537 = vpop.f32.mrf.mxu0
        %v538 = vadd.f32 %v252, %v537
        %v539 = vpop.f32.mrf.mxu0
        %540 = vmatprep.mubr.f32.mxu0 0.0
        %541 = vmatmul.mubr.f32.gmra.mxu0 %v331
        %v542 = vpop.f32.mrf.mxu0
        %v543 = vadd.f32 %v252, %v542
        %v544 = vpop.f32.mrf.mxu0
        %545 = vmatprep.mubr.f32.mxu0 0.0
        %546 = vmatmul.mubr.f32.gmra.mxu0 %v334
        %v547 = vpop.f32.mrf.mxu0
        %v548 = vadd.f32 %v252, %v547
        %v549 = vpop.f32.mrf.mxu0
        %550 = vmatprep.mubr.f32.mxu0 0.0
        %551 = vmatmul.mubr.f32.gmra.mxu0 %v337
        %v552 = vpop.f32.mrf.mxu0
        %v553 = vadd.f32 %v252, %v552
        %v554 = vpop.f32.mrf.mxu0
        %555 = vmatprep.mubr.f32.mxu0 0.0
        %556 = vmatmul.mubr.f32.gmra.mxu0 %v340
        %v557 = vpop.f32.mrf.mxu0
        %v558 = vadd.f32 %v252, %v557
        %v559 = vpop.f32.mrf.mxu0
        %560 = vmatprep.mubr.f32.mxu0 0.0
        %561 = vmatmul.mubr.f32.gmra.mxu0 %v343
        %v562 = vpop.f32.mrf.mxu0
        %v563 = vadd.f32 %v252, %v562
        %v564 = vpop.f32.mrf.mxu0
        %565 = vmatprep.mubr.f32.mxu0 0.0
        %566 = vmatmul.mubr.f32.gmra.mxu0 %v346
        %v567 = vpop.f32.mrf.mxu0
        %v568 = vadd.f32 %v252, %v567
        %v569 = vpop.f32.mrf.mxu0
        %570 = vmatprep.mubr.f32.mxu0 0.0
        %571 = vmatmul.mubr.f32.gmra.mxu0 %v349
        %v572 = vpop.f32.mrf.mxu0
        %v573 = vadd.f32 %v252, %v572
        %v574 = vpop.f32.mrf.mxu0
        %575 = vdwg.mxu0
        %vm576 = vcmp.gt.f32.partialorder %v418, 0.0
        %vm577 = vcmp.gt.f32.partialorder %v423, 0.0
        %vm578 = vcmp.gt.f32.partialorder %v428, 0.0
        %vm579 = vcmp.gt.f32.partialorder %v433, 0.0
        %vm580 = vcmp.gt.f32.partialorder %v438, 0.0
        %vm581 = vcmp.gt.f32.partialorder %v443, 0.0
        %vm582 = vcmp.gt.f32.partialorder %v448, 0.0
        %vm583 = vcmp.gt.f32.partialorder %v453, 0.0
        %vm584 = vcmp.gt.f32.partialorder %v458, 0.0
        %vm585 = vcmp.gt.f32.partialorder %v463, 0.0
        %vm586 = vcmp.gt.f32.partialorder %v468, 0.0
        %vm587 = vcmp.gt.f32.partialorder %v473, 0.0
        %vm588 = vcmp.gt.f32.partialorder %v478, 0.0
        %vm589 = vcmp.gt.f32.partialorder %v483, 0.0
        %vm590 = vcmp.gt.f32.partialorder %v488, 0.0
        %vm591 = vcmp.gt.f32.partialorder %v493, 0.0
        %vm592 = vcmp.gt.f32.partialorder %v498, 0.0
        %vm593 = vcmp.gt.f32.partialorder %v503, 0.0
        %vm594 = vcmp.gt.f32.partialorder %v508, 0.0
        %vm595 = vcmp.gt.f32.partialorder %v513, 0.0
        %vm596 = vcmp.gt.f32.partialorder %v518, 0.0
        %vm597 = vcmp.gt.f32.partialorder %v523, 0.0
        %vm598 = vcmp.gt.f32.partialorder %v528, 0.0
        %vm599 = vcmp.gt.f32.partialorder %v533, 0.0
        %vm600 = vcmp.gt.f32.partialorder %v538, 0.0
        %vm601 = vcmp.gt.f32.partialorder %v543, 0.0
        %vm602 = vcmp.gt.f32.partialorder %v548, 0.0
        %vm603 = vcmp.gt.f32.partialorder %v553, 0.0
        %vm604 = vcmp.gt.f32.partialorder %v558, 0.0
        %vm605 = vcmp.gt.f32.partialorder %v563, 0.0
        %vm606 = vcmp.gt.f32.partialorder %v568, 0.0
        %vm607 = vcmp.gt.f32.partialorder %v573, 0.0
        %v608 = vmul.f32 %v418, 0.1
        %v609 = vmul.f32 %v423, 0.1
        %v610 = vmul.f32 %v428, 0.1
        %v611 = vmul.f32 %v433, 0.1
        %v612 = vmul.f32 %v438, 0.1
        %v613 = vmul.f32 %v443, 0.1
        %v614 = vmul.f32 %v448, 0.1
        %v615 = vmul.f32 %v453, 0.1
        %v616 = vmul.f32 %v458, 0.1
        %v617 = vmul.f32 %v463, 0.1
        %v618 = vmul.f32 %v468, 0.1
        %v619 = vmul.f32 %v473, 0.1
        %v620 = vmul.f32 %v478, 0.1
        %v621 = vmul.f32 %v483, 0.1
        %v622 = vmul.f32 %v488, 0.1
        %v623 = vmul.f32 %v493, 0.1
        %v624 = vmul.f32 %v498, 0.1
        %v625 = vmul.f32 %v503, 0.1
        %v626 = vmul.f32 %v508, 0.1
        %v627 = vmul.f32 %v513, 0.1
        %v628 = vmul.f32 %v518, 0.1
        %v629 = vmul.f32 %v523, 0.1
        %v630 = vmul.f32 %v528, 0.1
        %v631 = vmul.f32 %v533, 0.1
        %v632 = vmul.f32 %v538, 0.1
        %v633 = vmul.f32 %v543, 0.1
        %v634 = vmul.f32 %v548, 0.1
        %v635 = vmul.f32 %v553, 0.1
        %v636 = vmul.f32 %v558, 0.1
        %v637 = vmul.f32 %v563, 0.1
        %v638 = vmul.f32 %v568, 0.1
        %v639 = vmul.f32 %v573, 0.1
        %v640 = vsel %vm576, %v418, %v608
        %v641 = vsel %vm577, %v423, %v609
        %v642 = vsel %vm578, %v428, %v610
        %v643 = vsel %vm579, %v433, %v611
        %v644 = vsel %vm580, %v438, %v612
        %v645 = vsel %vm581, %v443, %v613
        %v646 = vsel %vm582, %v448, %v614
        %v647 = vsel %vm583, %v453, %v615
        %v648 = vsel %vm584, %v458, %v616
        %v649 = vsel %vm585, %v463, %v617
        %v650 = vsel %vm586, %v468, %v618
        %v651 = vsel %vm587, %v473, %v619
        %v652 = vsel %vm588, %v478, %v620
        %v653 = vsel %vm589, %v483, %v621
        %v654 = vsel %vm590, %v488, %v622
        %v655 = vsel %vm591, %v493, %v623
        %v656 = vsel %vm592, %v498, %v624
        %v657 = vsel %vm593, %v503, %v625
        %v658 = vsel %vm594, %v508, %v626
        %v659 = vsel %vm595, %v513, %v627
        %v660 = vsel %vm596, %v518, %v628
        %v661 = vsel %vm597, %v523, %v629
        %v662 = vsel %vm598, %v528, %v630
        %v663 = vsel %vm599, %v533, %v631
        %v664 = vsel %vm600, %v538, %v632
        %v665 = vsel %vm601, %v543, %v633
        %v666 = vsel %vm602, %v548, %v634
        %v667 = vsel %vm603, %v553, %v635
        %v668 = vsel %vm604, %v558, %v636
        %v669 = vsel %vm605, %v563, %v637
        %v670 = vsel %vm606, %v568, %v638
        %v671 = vsel %vm607, %v573, %v639
        %672 = vst [vmem:[%s204] sm:$0xff] %v640
        %673 = vst [vmem:[%s204 + $0x10] sm:$0xff] %v641
        %674 = vst [vmem:[%s204 + $0x40] sm:$0xff] %v642
        %675 = vst [vmem:[%s204 + $0x50] sm:$0xff] %v643
        %676 = vst [vmem:[%s204 + $0x80] sm:$0xff] %v644
        %677 = vst [vmem:[%s204 + $0x90] sm:$0xff] %v645
        %678 = vst [vmem:[%s204 + $0xc0] sm:$0xff] %v646
        %679 = vst [vmem:[%s204 + $0xd0] sm:$0xff] %v647
        %680 = vst [vmem:[%s204 + $0x100] sm:$0xff] %v648
        %681 = vst [vmem:[%s204 + $0x110] sm:$0xff] %v649
        %682 = vst [vmem:[%s204 + $0x140] sm:$0xff] %v650
        %683 = vst [vmem:[%s204 + $0x150] sm:$0xff] %v651
        %684 = vst [vmem:[%s204 + $0x180] sm:$0xff] %v652
        %685 = vst [vmem:[%s204 + $0x190] sm:$0xff] %v653
        %686 = vst [vmem:[%s204 + $0x1c0] sm:$0xff] %v654
        %687 = vst [vmem:[%s204 + $0x1d0] sm:$0xff] %v655
        %688 = vst [vmem:[%s204 + $0x200] sm:$0xff] %v656
        %689 = vst [vmem:[%s204 + $0x210] sm:$0xff] %v657
        %690 = vst [vmem:[%s204 + $0x240] sm:$0xff] %v658
        %691 = vst [vmem:[%s204 + $0x250] sm:$0xff] %v659
        %692 = vst [vmem:[%s204 + $0x280] sm:$0xff] %v660
        %693 = vst [vmem:[%s204 + $0x290] sm:$0xff] %v661
        %694 = vst [vmem:[%s204 + $0x2c0] sm:$0xff] %v662
        %695 = vst [vmem:[%s204 + $0x2d0] sm:$0xff] %v663
        %696 = vst [vmem:[%s204 + $0x300] sm:$0xff] %v664
        %697 = vst [vmem:[%s204 + $0x310] sm:$0xff] %v665
        %698 = vst [vmem:[%s204 + $0x340] sm:$0xff] %v666
        %699 = vst [vmem:[%s204 + $0x350] sm:$0xff] %v667
        %700 = vst [vmem:[%s204 + $0x380] sm:$0xff] %v668
        %701 = vst [vmem:[%s204 + $0x390] sm:$0xff] %v669
        %702 = vst [vmem:[%s204 + $0x3c0] sm:$0xff] %v670
        %703 = vst [vmem:[%s204 + $0x3d0] sm:$0xff] %v671
        %704 = vst [vmem:[%s204 + $0x8] sm:$0xff] %v640
        %705 = vst [vmem:[%s204 + $0x18] sm:$0xff] %v641
        %706 = vst [vmem:[%s204 + $0x48] sm:$0xff] %v642
        %707 = vst [vmem:[%s204 + $0x58] sm:$0xff] %v643
        %708 = vst [vmem:[%s204 + $0x88] sm:$0xff] %v644
        %709 = vst [vmem:[%s204 + $0x98] sm:$0xff] %v645
        %710 = vst [vmem:[%s204 + $0xc8] sm:$0xff] %v646
        %711 = vst [vmem:[%s204 + $0xd8] sm:$0xff] %v647
        %712 = vst [vmem:[%s204 + $0x108] sm:$0xff] %v648
        %713 = vst [vmem:[%s204 + $0x118] sm:$0xff] %v649
        %714 = vst [vmem:[%s204 + $0x148] sm:$0xff] %v650
        %715 = vst [vmem:[%s204 + $0x158] sm:$0xff] %v651
        %716 = vst [vmem:[%s204 + $0x188] sm:$0xff] %v652
        %717 = vst [vmem:[%s204 + $0x198] sm:$0xff] %v653
        %718 = vst [vmem:[%s204 + $0x1c8] sm:$0xff] %v654
        %719 = vst [vmem:[%s204 + $0x1d8] sm:$0xff] %v655
        %720 = vst [vmem:[%s204 + $0x208] sm:$0xff] %v656
        %721 = vst [vmem:[%s204 + $0x218] sm:$0xff] %v657
        %722 = vst [vmem:[%s204 + $0x248] sm:$0xff] %v658
        %723 = vst [vmem:[%s204 + $0x258] sm:$0xff] %v659
        %724 = vst [vmem:[%s204 + $0x288] sm:$0xff] %v660
        %725 = vst [vmem:[%s204 + $0x298] sm:$0xff] %v661
        %726 = vst [vmem:[%s204 + $0x2c8] sm:$0xff] %v662
        %727 = vst [vmem:[%s204 + $0x2d8] sm:$0xff] %v663
        %728 = vst [vmem:[%s204 + $0x308] sm:$0xff] %v664
        %729 = vst [vmem:[%s204 + $0x318] sm:$0xff] %v665
        %730 = vst [vmem:[%s204 + $0x348] sm:$0xff] %v666
        %731 = vst [vmem:[%s204 + $0x358] sm:$0xff] %v667
        %732 = vst [vmem:[%s204 + $0x388] sm:$0xff] %v668
        %733 = vst [vmem:[%s204 + $0x398] sm:$0xff] %v669
        %734 = vst [vmem:[%s204 + $0x3c8] sm:$0xff] %v670
        %735 = vst [vmem:[%s204 + $0x3d8] sm:$0xff] %v671
        %s736 = scalar_lea.vmem %s204, 32 [#allocation7]
        %737 = vst [vmem:[%s736] sm:$0xff] %v640
        %738 = vst [vmem:[%s736 + $0x10] sm:$0xff] %v641
        %739 = vst [vmem:[%s736 + $0x40] sm:$0xff] %v642
        %740 = vst [vmem:[%s736 + $0x50] sm:$0xff] %v643
        %741 = vst [vmem:[%s736 + $0x80] sm:$0xff] %v644
        %742 = vst [vmem:[%s736 + $0x90] sm:$0xff] %v645
        %743 = vst [vmem:[%s736 + $0xc0] sm:$0xff] %v646
        %744 = vst [vmem:[%s736 + $0xd0] sm:$0xff] %v647
        %745 = vst [vmem:[%s736 + $0x100] sm:$0xff] %v648
        %746 = vst [vmem:[%s736 + $0x110] sm:$0xff] %v649
        %747 = vst [vmem:[%s736 + $0x140] sm:$0xff] %v650
        %748 = vst [vmem:[%s736 + $0x150] sm:$0xff] %v651
        %749 = vst [vmem:[%s736 + $0x180] sm:$0xff] %v652
        %750 = vst [vmem:[%s736 + $0x190] sm:$0xff] %v653
        %751 = vst [vmem:[%s736 + $0x1c0] sm:$0xff] %v654
        %752 = vst [vmem:[%s736 + $0x1d0] sm:$0xff] %v655
        %753 = vst [vmem:[%s736 + $0x200] sm:$0xff] %v656
        %754 = vst [vmem:[%s736 + $0x210] sm:$0xff] %v657
        %755 = vst [vmem:[%s736 + $0x240] sm:$0xff] %v658
        %756 = vst [vmem:[%s736 + $0x250] sm:$0xff] %v659
        %757 = vst [vmem:[%s736 + $0x280] sm:$0xff] %v660
        %758 = vst [vmem:[%s736 + $0x290] sm:$0xff] %v661
        %759 = vst [vmem:[%s736 + $0x2c0] sm:$0xff] %v662
        %760 = vst [vmem:[%s736 + $0x2d0] sm:$0xff] %v663
        %761 = vst [vmem:[%s736 + $0x300] sm:$0xff] %v664
        %762 = vst [vmem:[%s736 + $0x310] sm:$0xff] %v665
        %763 = vst [vmem:[%s736 + $0x340] sm:$0xff] %v666
        %764 = vst [vmem:[%s736 + $0x350] sm:$0xff] %v667
        %765 = vst [vmem:[%s736 + $0x380] sm:$0xff] %v668
        %766 = vst [vmem:[%s736 + $0x390] sm:$0xff] %v669
        %767 = vst [vmem:[%s736 + $0x3c0] sm:$0xff] %v670
        %768 = vst [vmem:[%s736 + $0x3d0] sm:$0xff] %v671
        %769 = vst [vmem:[%s736 + $0x8] sm:$0xff] %v640
        %770 = vst [vmem:[%s736 + $0x18] sm:$0xff] %v641
        %771 = vst [vmem:[%s736 + $0x48] sm:$0xff] %v642
        %772 = vst [vmem:[%s736 + $0x58] sm:$0xff] %v643
        %773 = vst [vmem:[%s736 + $0x88] sm:$0xff] %v644
        %774 = vst [vmem:[%s736 + $0x98] sm:$0xff] %v645
        %775 = vst [vmem:[%s736 + $0xc8] sm:$0xff] %v646
        %776 = vst [vmem:[%s736 + $0xd8] sm:$0xff] %v647
        %777 = vst [vmem:[%s736 + $0x108] sm:$0xff] %v648
        %778 = vst [vmem:[%s736 + $0x118] sm:$0xff] %v649
        %779 = vst [vmem:[%s736 + $0x148] sm:$0xff] %v650
        %780 = vst [vmem:[%s736 + $0x158] sm:$0xff] %v651
        %781 = vst [vmem:[%s736 + $0x188] sm:$0xff] %v652
        %782 = vst [vmem:[%s736 + $0x198] sm:$0xff] %v653
        %783 = vst [vmem:[%s736 + $0x1c8] sm:$0xff] %v654
        %784 = vst [vmem:[%s736 + $0x1d8] sm:$0xff] %v655
        %785 = vst [vmem:[%s736 + $0x208] sm:$0xff] %v656
        %786 = vst [vmem:[%s736 + $0x218] sm:$0xff] %v657
        %787 = vst [vmem:[%s736 + $0x248] sm:$0xff] %v658
        %788 = vst [vmem:[%s736 + $0x258] sm:$0xff] %v659
        %789 = vst [vmem:[%s736 + $0x288] sm:$0xff] %v660
        %790 = vst [vmem:[%s736 + $0x298] sm:$0xff] %v661
        %791 = vst [vmem:[%s736 + $0x2c8] sm:$0xff] %v662
        %792 = vst [vmem:[%s736 + $0x2d8] sm:$0xff] %v663
        %793 = vst [vmem:[%s736 + $0x308] sm:$0xff] %v664
        %794 = vst [vmem:[%s736 + $0x318] sm:$0xff] %v665
        %795 = vst [vmem:[%s736 + $0x348] sm:$0xff] %v666
        %796 = vst [vmem:[%s736 + $0x358] sm:$0xff] %v667
        %797 = vst [vmem:[%s736 + $0x388] sm:$0xff] %v668
        %798 = vst [vmem:[%s736 + $0x398] sm:$0xff] %v669
        %799 = vst [vmem:[%s736 + $0x3c8] sm:$0xff] %v670
        %800 = vst [vmem:[%s736 + $0x3d8] sm:$0xff] %v671
        %s801 = sand.u32 %s97, 1
        %s802 = scalar_lea.sflag [#allocation4], %s801
        %s803 = sand.u32 %s97, 1
        %s804 = smul.addr %s803, 1024
        %s805 = scalar_lea.vmem [#allocation7], %s804
        // Predicated region
        $region41: #{tpu_custom_call.1} parent=31 // pred_check
          %p806 = pneg %p107
        $region42: #{tpu_custom_call.1} parent=31 // pred_check_branch
          %808 = sbr.rel (%p806) target = $region44
        $region43: #{tpu_custom_call.1} parent=31 // pred_region
          %s809 = smul.u32 16, %s21
          %s811 = ssub.s32 16384, 16384
          %812 = vsyncadd %s802, %s811
          %s813 = smul.addr %s809, 8
          %s814 = smul.addr %s813, 128
          %s815 = scalar_lea.hbm %s3, %s814
          %s816 = sshll.u32 %s805, 4
          %s817 = int_to_ptr.vmem [resolvable:$true] %s816
          %822 = dma.vmem_to_hbm [thread:$0]  %s817, 16384, %s815, %s802, 256, 256, 16
        $region44: #{tpu_custom_call.1} parent=31 // pred_fallthru
          _
      $region32: #{tpu_custom_call.1} parent=5 // pred_fallthru
        _
      %p823 = scmp.le.s32.totalorder 2, %s16
      // Predicated region
      $region45: #{tpu_custom_call.1} parent=5 // pred_check
        %p824 = pneg %p823
      $region46: #{tpu_custom_call.1} parent=5 // pred_check_branch
        %826 = sbr.rel (%p824) target = $region48
      $region47: #{tpu_custom_call.1} parent=5 // pred_region
        %s827 = ssub.s32 %s16, 2
        // Predicated region
        $region49: #{tpu_custom_call.1} parent=47 // pred_check
          %p828 = pneg %p113
        $region50: #{tpu_custom_call.1} parent=47 // pred_check_branch
          %830 = sbr.rel (%p828) target = $region52
        $region51: #{tpu_custom_call.1} parent=47 // pred_region
          %s831 = sand.u32 %s98, 1
          %s832 = scalar_lea.sflag [#allocation4], %s831
          %s833 = sand.u32 %s98, 1
          %s834 = smul.addr %s833, 1024
          %s835 = scalar_lea.vmem [#allocation7], %s834
          %836 = dma.done %s832, 16384
        $region52: #{tpu_custom_call.1} parent=47 // pred_fallthru
          _
      $region48: #{tpu_custom_call.1} parent=5 // pred_fallthru
        _
    $region6: #{tpu_custom_call.1} parent=1 // loop_footer
      %s20 = sadd.s32 1, %s16
    $region7: #{tpu_custom_call.1} parent=1 // loop_footer_branch
      %15 = sbr.rel target = $region3
    $region8: #{tpu_custom_call.1} parent=1 // loop_exit
      _
    %837 = vsyncpa [#allocation3], 1
    %s838 = scalar_lea.sflag [#allocation3], 1
    %839 = vsyncpa %s838, 1
    %840 = vsyncpa [#allocation6], 1
    %841 = vsyncpa [#allocation4], 1
    %s842 = scalar_lea.sflag [#allocation4], 1
    %843 = vsyncpa %s842, 1

</llo_original>
